<compile_context>
chip_gen: v6e
topology: v6e:2x2x1
jax: 0.10.0
libtpu: 0.0.40
codegen_flags: <defaults>
</compile_context>

<pallas_src>
import functools

import jax
import jax.numpy as jnp
from jax.experimental import pallas as pl
from jax.experimental.pallas import tpu as pltpu

LEAKY_SLOPE = 0.01   # torch.nn.LeakyReLU default negative_slope
LANE = 128           # TPU lane width: feature dims padded to a multiple of this
SUB = 8              # sublane granularity


def _round_up(n, m):
    return (n + m - 1) // m * m


def _leaky_relu(v):
    return jnp.where(v >= 0, v, LEAKY_SLOPE * v)


def probmlp_kernel(x_ref, w_ref, b_ref, mu_ref, *, f):
    """One batch tile of the ProbMLP matmul chain.

    x_ref : (TB, F)   bf16  feature-padded activations
    w_ref : (4*F, F)  bf16  packed [w1; w2; w3; wmu], each (F, F), zero-padded
    b_ref : (8, F)    f32   rows 0..3 = b1, b2, b3, bmu (zero-padded)
    mu_ref: (TB, F)   f32   lane-dense padded mu output
    """

    def layer(h_bf16, idx, activate):
        w = w_ref[idx * f:(idx + 1) * f, :]          # static slice of resident weights
        b = b_ref[idx:idx + 1, :]                    # (1, F) f32 bias row
        h = jnp.dot(h_bf16, w, preferred_element_type=jnp.float32) + b
        if activate:
            h = _leaky_relu(h)                       # f32 VPU math (v5e-safe)
        return h

    h = layer(x_ref[...], 0, True).astype(jnp.bfloat16)   # Linear -> LeakyReLU
    h = layer(h, 1, True).astype(jnp.bfloat16)             # Linear -> LeakyReLU
    h = layer(h, 2, True).astype(jnp.bfloat16)              # Linear, then mu head's LeakyReLU
    mu = layer(h, 3, False)                                  # mu head Linear
    mu_ref[...] = mu.astype(mu_ref.dtype)


def prob_mlp_forward(x, params):
    """Returns (mu, std) of the Normal distribution produced by ProbMLP.forward."""
    B, in_size = x.shape
    hidden = params["w1"].shape[1]
    out_size = params["wmu"].shape[1]

    # Common padded feature width (lane-dense everywhere).
    F = max(_round_up(in_size, LANE),
            _round_up(hidden, LANE),
            _round_up(out_size, LANE))

    # Batch tile: large tiles amortize per-step overhead; clamp for small demos.
    TB = min(256, _round_up(B, SUB))
    B_pad = _round_up(B, TB)

    # ---- pack parameters into two pre-padded, resident buffers ----
    def pad2(a, rows, cols):
        return jnp.pad(a, ((0, rows - a.shape[0]), (0, cols - a.shape[1])))

    w_packed = jnp.concatenate(
        [pad2(params["w1"], F, F),
         pad2(params["w2"], F, F),
         pad2(params["w3"], F, F),
         pad2(params["wmu"], F, F)], axis=0).astype(jnp.bfloat16)        # (4F, F)

    b_rows = jnp.stack(
        [jnp.pad(params["b1"], (0, F - hidden)),
         jnp.pad(params["b2"], (0, F - hidden)),
         jnp.pad(params["b3"], (0, F - hidden)),
         jnp.pad(params["bmu"], (0, F - out_size))], axis=0)
    b_packed = jnp.pad(b_rows, ((0, SUB - 4), (0, 0))).astype(jnp.float32)  # (8, F)

    x_pad = jnp.pad(x, ((0, B_pad - B), (0, F - in_size))).astype(jnp.bfloat16)

    grid = (B_pad // TB,)
    flops = 2 * B_pad * 4 * F * F
    bytes_accessed = (x_pad.size * 2 + w_packed.size * 2
                      + b_packed.size * 4 + B_pad * F * 4)

    mu_pad = pl.pallas_call(
        functools.partial(probmlp_kernel, f=F),
        out_shape=jax.ShapeDtypeStruct((B_pad, F), jnp.float32),
        grid_spec=pltpu.PrefetchScalarGridSpec(
            num_scalar_prefetch=0,
            grid=grid,
            in_specs=[
                pl.BlockSpec((TB, F), lambda i: (i, 0)),        # x: batch-tiled
                pl.BlockSpec((4 * F, F), lambda i: (0, 0)),     # weights: resident
                pl.BlockSpec((SUB, F), lambda i: (0, 0)),       # biases: resident
            ],
            out_specs=pl.BlockSpec((TB, F), lambda i: (i, 0)),  # lane-dense mu
        ),
        compiler_params=pltpu.CompilerParams(
            dimension_semantics=("parallel",),                  # 2-TC sharding on v7x
            vmem_limit_bytes=32 * 1024 * 1024,
        ),
        cost_estimate=pl.CostEstimate(
            flops=flops, transcendentals=0, bytes_accessed=bytes_accessed),
    )(x_pad, w_packed, b_packed)

    mu = mu_pad[:B, :out_size]
    # std depends only on logstd -> computed outside the kernel (hoisted).
    std = jnp.broadcast_to(jnp.exp(params["logstd"]).reshape(1, -1), (B, out_size))
    return mu, std


def init_params(key, input_size, output_size, hidden_size):
    """Deterministic synthetic parameters matching ProbMLP.__init__ shapes.

    Weights stored (in_features, out_features), biases (out_features,)."""
    ks = jax.random.split(key, 8)

    def linear(kw, kb, fan_in, fan_out):
        bound = 1.0 / (fan_in ** 0.5)
        w = jax.random.uniform(kw, (fan_in, fan_out), jnp.float32, -bound, bound)
        b = jax.random.uniform(kb, (fan_out,), jnp.float32, -bound, bound)
        return w, b

    w1, b1 = linear(ks[0], ks[1], input_size, hidden_size)
    w2, b2 = linear(ks[2], ks[3], hidden_size, hidden_size)
    w3, b3 = linear(ks[4], ks[5], hidden_size, hidden_size)
    wmu, bmu = linear(ks[6], ks[7], hidden_size, output_size)
    logstd = jnp.full((output_size,), -2.0, dtype=jnp.float32)  # torch.ones(out) * -2
    return dict(w1=w1, b1=b1, w2=w2, b2=b2, w3=w3, b3=b3,
                wmu=wmu, bmu=bmu, logstd=logstd)


def reference_forward_f32(x, p):
    h = _leaky_relu(x @ p["w1"] + p["b1"])
    h = _leaky_relu(h @ p["w2"] + p["b2"])
    h = _leaky_relu(h @ p["w3"] + p["b3"])
    mu = h @ p["wmu"] + p["bmu"]
    std = jnp.exp(p["logstd"]) * jnp.ones_like(mu)
    return mu, std


def reference_forward_bf16(x, p):
    """Mirrors the kernel's bf16-operand / f32-accumulate arithmetic."""
    def lin(h, w, b):
        return jnp.dot(h.astype(jnp.bfloat16), w.astype(jnp.bfloat16),
                       preferred_element_type=jnp.float32) + b
    h = _leaky_relu(lin(x, p["w1"], p["b1"]))
    h = _leaky_relu(lin(h, p["w2"], p["b2"]))
    h = _leaky_relu(lin(h, p["w3"], p["b3"]))
    return lin(h, p["wmu"], p["bmu"])


if __name__ == "__main__":
    input_size, output_size, hidden_size = 16, 8, 32
    batch = 8

    key = jax.random.PRNGKey(0)
    k_x, k_p = jax.random.split(key)
    x = jax.random.normal(k_x, (batch, input_size), dtype=jnp.float32)
    params = init_params(k_p, input_size, output_size, hidden_size)

    mu, std = jax.jit(prob_mlp_forward)(x, params)
    jax.block_until_ready((mu, std))

    assert mu.shape == (batch, output_size) and std.shape == (batch, output_size)

    # Same-precision (bf16-operand) reference: tight tolerance.
    mu_bf16_ref = reference_forward_bf16(x, params)
    assert jnp.allclose(mu, mu_bf16_ref, atol=2e-3, rtol=2e-3)

    # Full-f32 PyTorch-semantics reference: loose tolerance for bf16 MXU inputs.
    mu_f32_ref, std_ref = reference_forward_f32(x, params)
    assert jnp.allclose(mu, mu_f32_ref, atol=3e-2, rtol=3e-2)
    assert jnp.allclose(std, std_ref, atol=1e-6, rtol=1e-6)

    print("KERNEL_OK")
</pallas_src>

<mosaic_0001>
module attributes {stable_mosaic.version = 11 : i64} {
  func.func @probmlp_kernel(%arg0: i32, %arg1: memref<8x128xbf16, #tpu.memory_space<vmem>>, %arg2: memref<512x128xbf16, #tpu.memory_space<vmem>>, %arg3: memref<8x128xf32, #tpu.memory_space<vmem>>, %arg4: memref<8x128xf32, #tpu.memory_space<vmem>>) attributes {dimension_semantics = [#tpu.dimension_semantics<parallel>], iteration_bounds = array<i64: 1>, scalar_prefetch = 0 : i64, scratch_operands = 0 : i64, tpu.core_type = #tpu.core_type<tc>, window_params = [{transform_indices = @transform_0, window_bounds = array<i64: 8, 128>}, {pipeline_mode = #tpu.pipeline_mode<synchronous>, transform_indices = @transform_1, window_bounds = array<i64: 512, 128>}, {pipeline_mode = #tpu.pipeline_mode<synchronous>, transform_indices = @transform_2, window_bounds = array<i64: 8, 128>}, {transform_indices = @transform_3, window_bounds = array<i64: 8, 128>}]} {
    %c0 = arith.constant 0 : index
    %c0_0 = arith.constant 0 : index
    %0 = vector.load %arg1[%c0, %c0_0] : memref<8x128xbf16, #tpu.memory_space<vmem>>, vector<8x128xbf16>
    %c0_1 = arith.constant 0 : index
    %c0_2 = arith.constant 0 : index
    %1 = vector.load %arg2[%c0_1, %c0_2] : memref<512x128xbf16, #tpu.memory_space<vmem>>, vector<128x128xbf16>
    %c0_3 = arith.constant 0 : index
    %c0_4 = arith.constant 0 : index
    %2 = vector.load %arg3[%c0_3, %c0_4] : memref<8x128xf32, #tpu.memory_space<vmem>>, vector<1x128xf32>
    %cst = arith.constant dense<0.000000e+00> : vector<8x128xf32>
    %3 = tpu.matmul %0, %1, %cst {dimension_numbers = #tpu.dot_dimension_numbers<[1], [0], [0], [1], [0, 0, 1, 1], [], []>} : vector<8x128xbf16>, vector<128x128xbf16>, vector<8x128xf32> -> vector<8x128xf32>
    %4 = vector.broadcast %2 : vector<1x128xf32> to vector<8x128xf32>
    %5 = arith.addf %3, %4 : vector<8x128xf32>
    %cst_5 = arith.constant 0.000000e+00 : f32
    %6 = vector.broadcast %cst_5 : f32 to vector<8x128xf32>
    %7 = arith.cmpf oge, %5, %6 : vector<8x128xf32>
    %cst_6 = arith.constant 0.00999999977 : f32
    %8 = vector.broadcast %cst_6 : f32 to vector<8x128xf32>
    %9 = arith.mulf %8, %5 : vector<8x128xf32>
    %10 = arith.select %7, %5, %9 : vector<8x128xi1>, vector<8x128xf32>
    %11 = arith.truncf %10 : vector<8x128xf32> to vector<8x128xbf16>
    %c128 = arith.constant 128 : index
    %c0_7 = arith.constant 0 : index
    %12 = vector.load %arg2[%c128, %c0_7] : memref<512x128xbf16, #tpu.memory_space<vmem>>, vector<128x128xbf16>
    %c1 = arith.constant 1 : index
    %c0_8 = arith.constant 0 : index
    %13 = vector.load %arg3[%c1, %c0_8] : memref<8x128xf32, #tpu.memory_space<vmem>>, vector<1x128xf32>
    %cst_9 = arith.constant dense<0.000000e+00> : vector<8x128xf32>
    %14 = tpu.matmul %11, %12, %cst_9 {dimension_numbers = #tpu.dot_dimension_numbers<[1], [0], [0], [1], [0, 0, 1, 1], [], []>} : vector<8x128xbf16>, vector<128x128xbf16>, vector<8x128xf32> -> vector<8x128xf32>
    %15 = vector.broadcast %13 : vector<1x128xf32> to vector<8x128xf32>
    %16 = arith.addf %14, %15 : vector<8x128xf32>
    %cst_10 = arith.constant 0.000000e+00 : f32
    %17 = vector.broadcast %cst_10 : f32 to vector<8x128xf32>
    %18 = arith.cmpf oge, %16, %17 : vector<8x128xf32>
    %cst_11 = arith.constant 0.00999999977 : f32
    %19 = vector.broadcast %cst_11 : f32 to vector<8x128xf32>
    %20 = arith.mulf %19, %16 : vector<8x128xf32>
    %21 = arith.select %18, %16, %20 : vector<8x128xi1>, vector<8x128xf32>
    %22 = arith.truncf %21 : vector<8x128xf32> to vector<8x128xbf16>
    %c256 = arith.constant 256 : index
    %c0_12 = arith.constant 0 : index
    %23 = vector.load %arg2[%c256, %c0_12] : memref<512x128xbf16, #tpu.memory_space<vmem>>, vector<128x128xbf16>
    %c2 = arith.constant 2 : index
    %c0_13 = arith.constant 0 : index
    %24 = vector.load %arg3[%c2, %c0_13] : memref<8x128xf32, #tpu.memory_space<vmem>>, vector<1x128xf32>
    %cst_14 = arith.constant dense<0.000000e+00> : vector<8x128xf32>
    %25 = tpu.matmul %22, %23, %cst_14 {dimension_numbers = #tpu.dot_dimension_numbers<[1], [0], [0], [1], [0, 0, 1, 1], [], []>} : vector<8x128xbf16>, vector<128x128xbf16>, vector<8x128xf32> -> vector<8x128xf32>
    %26 = vector.broadcast %24 : vector<1x128xf32> to vector<8x128xf32>
    %27 = arith.addf %25, %26 : vector<8x128xf32>
    %cst_15 = arith.constant 0.000000e+00 : f32
    %28 = vector.broadcast %cst_15 : f32 to vector<8x128xf32>
    %29 = arith.cmpf oge, %27, %28 : vector<8x128xf32>
    %cst_16 = arith.constant 0.00999999977 : f32
    %30 = vector.broadcast %cst_16 : f32 to vector<8x128xf32>
    %31 = arith.mulf %30, %27 : vector<8x128xf32>
    %32 = arith.select %29, %27, %31 : vector<8x128xi1>, vector<8x128xf32>
    %33 = arith.truncf %32 : vector<8x128xf32> to vector<8x128xbf16>
    %c384 = arith.constant 384 : index
    %c0_17 = arith.constant 0 : index
    %34 = vector.load %arg2[%c384, %c0_17] : memref<512x128xbf16, #tpu.memory_space<vmem>>, vector<128x128xbf16>
    %c3 = arith.constant 3 : index
    %c0_18 = arith.constant 0 : index
    %35 = vector.load %arg3[%c3, %c0_18] : memref<8x128xf32, #tpu.memory_space<vmem>>, vector<1x128xf32>
    %cst_19 = arith.constant dense<0.000000e+00> : vector<8x128xf32>
    %36 = tpu.matmul %33, %34, %cst_19 {dimension_numbers = #tpu.dot_dimension_numbers<[1], [0], [0], [1], [0, 0, 1, 1], [], []>} : vector<8x128xbf16>, vector<128x128xbf16>, vector<8x128xf32> -> vector<8x128xf32>
    %37 = vector.broadcast %35 : vector<1x128xf32> to vector<8x128xf32>
    %38 = arith.addf %36, %37 : vector<8x128xf32>
    %c0_20 = arith.constant 0 : index
    %c0_21 = arith.constant 0 : index
    %39 = vector.load %arg4[%c0_20, %c0_21] : memref<8x128xf32, #tpu.memory_space<vmem>>, vector<8x128xf32>
    tpu.vector_store %arg4[%c0_20, %c0_21], %38 {strides = array<i32>} : memref<8x128xf32, #tpu.memory_space<vmem>>, vector<8x128xf32>,
    return
  }
  func.func @transform_0(%arg0: i32) -> (i32, i32) {
    %c0_i32 = arith.constant 0 : i32
    %c0_i32_0 = arith.constant 0 : i32
    return %arg0, %c0_i32 : i32, i32
  }
  func.func @transform_1(%arg0: i32) -> (i32, i32) {
    %c0_i32 = arith.constant 0 : i32
    %c0_i32_0 = arith.constant 0 : i32
    %c0_i32_1 = arith.constant 0 : i32
    return %c0_i32, %c0_i32_0 : i32, i32
  }
  func.func @transform_2(%arg0: i32) -> (i32, i32) {
    %c0_i32 = arith.constant 0 : i32
    %c0_i32_0 = arith.constant 0 : i32
    %c0_i32_1 = arith.constant 0 : i32
    return %c0_i32, %c0_i32_0 : i32, i32
  }
  func.func @transform_3(%arg0: i32) -> (i32, i32) {
    %c0_i32 = arith.constant 0 : i32
    %c0_i32_0 = arith.constant 0 : i32
    return %arg0, %c0_i32 : i32, i32
  }
}

</mosaic_0001>

<llo_original>
// kernel: prob_mlp_forward.1
$region0: #{prob_mlp_forward.1}
  #allocation0 [shape = 'u32[]', space=smem, size = 0x4, offset = 0x4, fixed_abs, tag = 'smem constant byte address 0x4 - core index']
  #allocation1 [shape = 'u32[144,128]{1,0:T(1,128)}', space=vmem, size = 0x12000, scoped, tag = 'internal scratch']
  %s0 = inlined_call_operand.vmem [shape: bf16[8,128], index: 0, kind: input, shape index: {}]
  %s1 = inlined_call_operand.vmem [shape: bf16[512,128], index: 1, kind: input, shape index: {}]
  %s2 = inlined_call_operand.vmem [shape: f32[8,128], index: 2, kind: input, shape index: {}]
  %s3 = inlined_call_operand.hbm [shape: f32[8,128], index: 3, kind: output, shape index: {}]
  %s4 = sld [smem:[#allocation0]]
  $region22: #{prob_mlp_forward.1} parent=0
    _
  %s6 = ssub.s32 1, %s4
  %s7 = scalar_select 0, %s6, %s4
  $region1: #{prob_mlp_forward.1} parent=0
    #allocation2 [shape = 'u8[4096]{0}', space=vmem, size = 0x1000, scoped, tag = 'output window, operand 0, single buffered']
    #allocation3 [shape = 's32[1]{0}', space=sflag, size = 0x4, scoped, tag = 'scoped memory for prob_mlp_forward.1']
    %8 = vsyncpa [#allocation3], 0
    // Predicated region
    $region2: #{prob_mlp_forward.1} parent=1 // pred_check
      _
    $region3: #{prob_mlp_forward.1} parent=1 // pred_check_branch
      %10 = sbr.rel (0) target = $region5
    $region4: #{prob_mlp_forward.1} parent=1 // pred_region
      _
    $region5: #{prob_mlp_forward.1} parent=1 // pred_fallthru
      _
    // Predicated region
    $region6: #{prob_mlp_forward.1} parent=1 // pred_check
      _
    $region7: #{prob_mlp_forward.1} parent=1 // pred_check_branch
      %12 = sbr.rel (0) target = $region9
    $region8: #{prob_mlp_forward.1} parent=1 // pred_region
      _
    $region9: #{prob_mlp_forward.1} parent=1 // pred_fallthru
      _
    // Predicated region
    $region10: #{prob_mlp_forward.1} parent=1 // pred_check
      _
    $region11: #{prob_mlp_forward.1} parent=1 // pred_check_branch
      %14 = sbr.rel (0) target = $region13
    $region12: #{prob_mlp_forward.1} parent=1 // pred_region
      _
    $region13: #{prob_mlp_forward.1} parent=1 // pred_fallthru
      _
    %v16 = vld [vmem:[%s0] sm:$0xf]
    %v17 = vld [vmem:[%s1] sm:$0xf]
    %v18 = vld [vmem:[%s1 + $0x4] sm:$0xf]
    %v19 = vld [vmem:[%s1 + $0x8] sm:$0xf]
    %v20 = vld [vmem:[%s1 + $0xc] sm:$0xf]
    %v21 = vld [vmem:[%s1 + $0x10] sm:$0xf]
    %v22 = vld [vmem:[%s1 + $0x14] sm:$0xf]
    %v23 = vld [vmem:[%s1 + $0x18] sm:$0xf]
    %v24 = vld [vmem:[%s1 + $0x1c] sm:$0xf]
    %v25 = vld [vmem:[%s1 + $0x20] sm:$0xf]
    %v26 = vld [vmem:[%s1 + $0x24] sm:$0xf]
    %v27 = vld [vmem:[%s1 + $0x28] sm:$0xf]
    %v28 = vld [vmem:[%s1 + $0x2c] sm:$0xf]
    %v29 = vld [vmem:[%s1 + $0x30] sm:$0xf]
    %v30 = vld [vmem:[%s1 + $0x34] sm:$0xf]
    %v31 = vld [vmem:[%s1 + $0x38] sm:$0xf]
    %v32 = vld [vmem:[%s1 + $0x3c] sm:$0xf]
    %v33 = vld [vmem:[%s2] sm:$0x1]
    %v34 = vlaneseq
    %v35 = vshrl.u32 %v34, 7
    %v36 = vsub.s32 0, %v35
    %v37 = vrot.slane %v33, %v36
    %v54 = vunpack.c.l.b16 %v17
    %v55 = vunpack.c.l.b16 %v18
    %v56 = vunpack.c.l.b16 %v19
    %v57 = vunpack.c.l.b16 %v20
    %v58 = vunpack.c.l.b16 %v21
    %v59 = vunpack.c.l.b16 %v22
    %v60 = vunpack.c.l.b16 %v23
    %v61 = vunpack.c.l.b16 %v24
    %v62 = vunpack.c.l.b16 %v25
    %v63 = vunpack.c.l.b16 %v26
    %v64 = vunpack.c.l.b16 %v27
    %v65 = vunpack.c.l.b16 %v28
    %v66 = vunpack.c.l.b16 %v29
    %v67 = vunpack.c.l.b16 %v30
    %v68 = vunpack.c.l.b16 %v31
    %v69 = vunpack.c.l.b16 %v32
    %v70 = vpack.c.b16 %v55, %v54
    %v71 = vpack.c.b16 %v57, %v56
    %v72 = vpack.c.b16 %v59, %v58
    %v73 = vpack.c.b16 %v61, %v60
    %v74 = vpack.c.b16 %v63, %v62
    %v75 = vpack.c.b16 %v65, %v64
    %v76 = vpack.c.b16 %v67, %v66
    %v77 = vpack.c.b16 %v69, %v68
    %86 = vmatprep.subr.bf16.mxu0 0
    %87 = vmatpush1.bf16.msra.mxu0 %v77
    %88 = vmatprep.subr.bf16.mxu0 0
    %89 = vmatpush1.bf16.msra.mxu0 %v76
    %90 = vmatprep.subr.bf16.mxu0 0
    %91 = vmatpush1.bf16.msra.mxu0 %v75
    %92 = vmatprep.subr.bf16.mxu0 0
    %93 = vmatpush1.bf16.msra.mxu0 %v74
    %94 = vmatprep.subr.bf16.mxu0 0
    %95 = vmatpush1.bf16.msra.mxu0 %v73
    %96 = vmatprep.subr.bf16.mxu0 0
    %97 = vmatpush1.bf16.msra.mxu0 %v72
    %98 = vmatprep.subr.bf16.mxu0 0
    %99 = vmatpush1.bf16.msra.mxu0 %v71
    %100 = vmatprep.subr.bf16.mxu0 0
    %101 = vmatpush1.bf16.msra.mxu0 %v70
    %102 = vmatprep.subr.bf16.mxu0 0
    %103 = vmatpush2.bf16.msra.mxu0 0
    %104 = vmatprep.subr.bf16.mxu0 0
    %105 = vmatpush2.bf16.msra.mxu0 0
    %106 = vmatprep.subr.bf16.mxu0 0
    %107 = vmatpush2.bf16.msra.mxu0 0
    %108 = vmatprep.subr.bf16.mxu0 0
    %109 = vmatpush2.bf16.msra.mxu0 0
    %110 = vmatprep.subr.bf16.mxu0 0
    %111 = vmatpush2.bf16.msra.mxu0 0
    %112 = vmatprep.subr.bf16.mxu0 0
    %113 = vmatpush2.bf16.msra.mxu0 0
    %114 = vmatprep.subr.bf16.mxu0 0
    %115 = vmatpush2.bf16.msra.mxu0 0
    %116 = vmatprep.subr.bf16.mxu0 0
    %117 = vmatpush2.bf16.msra.mxu0 0
    %118 = vmatprep.mubr.bf16.mxu0 0
    %119 = vmatmul.mubr.bf16.gmra.mxu0 %v16
    %v120 = vpop.f32.mrf.mxu0
    %v121 = vadd.f32 %v37, %v120
    %v122 = vpop.f32.mrf.mxu0
    %v123 = vpop.f32.mrf.mxu0
    %v124 = vpop.f32.mrf.mxu0
    %125 = vdwg.mxu0
    %vm126 = vcmp.ge.f32.partialorder %v121, 0.0
    %v127 = vmul.f32 %v121, 0.01
    %v128 = vsel %vm126, %v121, %v127
    %v129 = vpack.c.bf16 %v128, %v128
    %v130 = vld [vmem:[%s1 + $0x40] sm:$0xf]
    %v131 = vld [vmem:[%s1 + $0x44] sm:$0xf]
    %v132 = vld [vmem:[%s1 + $0x48] sm:$0xf]
    %v133 = vld [vmem:[%s1 + $0x4c] sm:$0xf]
    %v134 = vld [vmem:[%s1 + $0x50] sm:$0xf]
    %v135 = vld [vmem:[%s1 + $0x54] sm:$0xf]
    %v136 = vld [vmem:[%s1 + $0x58] sm:$0xf]
    %v137 = vld [vmem:[%s1 + $0x5c] sm:$0xf]
    %v138 = vld [vmem:[%s1 + $0x60] sm:$0xf]
    %v139 = vld [vmem:[%s1 + $0x64] sm:$0xf]
    %v140 = vld [vmem:[%s1 + $0x68] sm:$0xf]
    %v141 = vld [vmem:[%s1 + $0x6c] sm:$0xf]
    %v142 = vld [vmem:[%s1 + $0x70] sm:$0xf]
    %v143 = vld [vmem:[%s1 + $0x74] sm:$0xf]
    %v144 = vld [vmem:[%s1 + $0x78] sm:$0xf]
    %v145 = vld [vmem:[%s1 + $0x7c] sm:$0xf]
    %v146 = vld [vmem:[%s2 + $0x1] sm:$0x1]
    %v147 = vlaneseq
    %v148 = vshrl.u32 %v147, 7
    %v149 = vsub.s32 0, %v148
    %v150 = vrot.slane %v146, %v149
    %v167 = vunpack.c.l.b16 %v130
    %v168 = vunpack.c.l.b16 %v131
    %v169 = vunpack.c.l.b16 %v132
    %v170 = vunpack.c.l.b16 %v133
    %v171 = vunpack.c.l.b16 %v134
    %v172 = vunpack.c.l.b16 %v135
    %v173 = vunpack.c.l.b16 %v136
    %v174 = vunpack.c.l.b16 %v137
    %v175 = vunpack.c.l.b16 %v138
    %v176 = vunpack.c.l.b16 %v139
    %v177 = vunpack.c.l.b16 %v140
    %v178 = vunpack.c.l.b16 %v141
    %v179 = vunpack.c.l.b16 %v142
    %v180 = vunpack.c.l.b16 %v143
    %v181 = vunpack.c.l.b16 %v144
    %v182 = vunpack.c.l.b16 %v145
    %v183 = vpack.c.b16 %v168, %v167
    %v184 = vpack.c.b16 %v170, %v169
    %v185 = vpack.c.b16 %v172, %v171
    %v186 = vpack.c.b16 %v174, %v173
    %v187 = vpack.c.b16 %v176, %v175
    %v188 = vpack.c.b16 %v178, %v177
    %v189 = vpack.c.b16 %v180, %v179
    %v190 = vpack.c.b16 %v182, %v181
    %199 = vmatprep.subr.bf16.mxu0 0
    %200 = vmatpush1.bf16.msra.mxu0 %v190
    %201 = vmatprep.subr.bf16.mxu0 0
    %202 = vmatpush1.bf16.msra.mxu0 %v189
    %203 = vmatprep.subr.bf16.mxu0 0
    %204 = vmatpush1.bf16.msra.mxu0 %v188
    %205 = vmatprep.subr.bf16.mxu0 0
    %206 = vmatpush1.bf16.msra.mxu0 %v187
    %207 = vmatprep.subr.bf16.mxu0 0
    %208 = vmatpush1.bf16.msra.mxu0 %v186
    %209 = vmatprep.subr.bf16.mxu0 0
    %210 = vmatpush1.bf16.msra.mxu0 %v185
    %211 = vmatprep.subr.bf16.mxu0 0
    %212 = vmatpush1.bf16.msra.mxu0 %v184
    %213 = vmatprep.subr.bf16.mxu0 0
    %214 = vmatpush1.bf16.msra.mxu0 %v183
    %215 = vmatprep.subr.bf16.mxu0 0
    %216 = vmatpush2.bf16.msra.mxu0 0
    %217 = vmatprep.subr.bf16.mxu0 0
    %218 = vmatpush2.bf16.msra.mxu0 0
    %219 = vmatprep.subr.bf16.mxu0 0
    %220 = vmatpush2.bf16.msra.mxu0 0
    %221 = vmatprep.subr.bf16.mxu0 0
    %222 = vmatpush2.bf16.msra.mxu0 0
    %223 = vmatprep.subr.bf16.mxu0 0
    %224 = vmatpush2.bf16.msra.mxu0 0
    %225 = vmatprep.subr.bf16.mxu0 0
    %226 = vmatpush2.bf16.msra.mxu0 0
    %227 = vmatprep.subr.bf16.mxu0 0
    %228 = vmatpush2.bf16.msra.mxu0 0
    %229 = vmatprep.subr.bf16.mxu0 0
    %230 = vmatpush2.bf16.msra.mxu0 0
    %231 = vmatprep.mubr.bf16.mxu0 0
    %232 = vmatmul.mubr.bf16.gmra.mxu0 %v129
    %v233 = vpop.f32.mrf.mxu0
    %v234 = vadd.f32 %v150, %v233
    %v235 = vpop.f32.mrf.mxu0
    %v236 = vpop.f32.mrf.mxu0
    %v237 = vpop.f32.mrf.mxu0
    %238 = vdwg.mxu0
    %vm239 = vcmp.ge.f32.partialorder %v234, 0.0
    %v240 = vmul.f32 %v234, 0.01
    %v241 = vsel %vm239, %v234, %v240
    %v242 = vpack.c.bf16 %v241, %v241
    %v243 = vld [vmem:[%s1 + $0x80] sm:$0xf]
    %v244 = vld [vmem:[%s1 + $0x84] sm:$0xf]
    %v245 = vld [vmem:[%s1 + $0x88] sm:$0xf]
    %v246 = vld [vmem:[%s1 + $0x8c] sm:$0xf]
    %v247 = vld [vmem:[%s1 + $0x90] sm:$0xf]
    %v248 = vld [vmem:[%s1 + $0x94] sm:$0xf]
    %v249 = vld [vmem:[%s1 + $0x98] sm:$0xf]
    %v250 = vld [vmem:[%s1 + $0x9c] sm:$0xf]
    %v251 = vld [vmem:[%s1 + $0xa0] sm:$0xf]
    %v252 = vld [vmem:[%s1 + $0xa4] sm:$0xf]
    %v253 = vld [vmem:[%s1 + $0xa8] sm:$0xf]
    %v254 = vld [vmem:[%s1 + $0xac] sm:$0xf]
    %v255 = vld [vmem:[%s1 + $0xb0] sm:$0xf]
    %v256 = vld [vmem:[%s1 + $0xb4] sm:$0xf]
    %v257 = vld [vmem:[%s1 + $0xb8] sm:$0xf]
    %v258 = vld [vmem:[%s1 + $0xbc] sm:$0xf]
    %v259 = vld [vmem:[%s2 + $0x2] sm:$0x1]
    %v260 = vlaneseq
    %v261 = vshrl.u32 %v260, 7
    %v262 = vsub.s32 0, %v261
    %v263 = vrot.slane %v259, %v262
    %v280 = vunpack.c.l.b16 %v243
    %v281 = vunpack.c.l.b16 %v244
    %v282 = vunpack.c.l.b16 %v245
    %v283 = vunpack.c.l.b16 %v246
    %v284 = vunpack.c.l.b16 %v247
    %v285 = vunpack.c.l.b16 %v248
    %v286 = vunpack.c.l.b16 %v249
    %v287 = vunpack.c.l.b16 %v250
    %v288 = vunpack.c.l.b16 %v251
    %v289 = vunpack.c.l.b16 %v252
    %v290 = vunpack.c.l.b16 %v253
    %v291 = vunpack.c.l.b16 %v254
    %v292 = vunpack.c.l.b16 %v255
    %v293 = vunpack.c.l.b16 %v256
    %v294 = vunpack.c.l.b16 %v257
    %v295 = vunpack.c.l.b16 %v258
    %v296 = vpack.c.b16 %v281, %v280
    %v297 = vpack.c.b16 %v283, %v282
    %v298 = vpack.c.b16 %v285, %v284
    %v299 = vpack.c.b16 %v287, %v286
    %v300 = vpack.c.b16 %v289, %v288
    %v301 = vpack.c.b16 %v291, %v290
    %v302 = vpack.c.b16 %v293, %v292
    %v303 = vpack.c.b16 %v295, %v294
    %312 = vmatprep.subr.bf16.mxu0 0
    %313 = vmatpush1.bf16.msra.mxu0 %v303
    %314 = vmatprep.subr.bf16.mxu0 0
    %315 = vmatpush1.bf16.msra.mxu0 %v302
    %316 = vmatprep.subr.bf16.mxu0 0
    %317 = vmatpush1.bf16.msra.mxu0 %v301
    %318 = vmatprep.subr.bf16.mxu0 0
    %319 = vmatpush1.bf16.msra.mxu0 %v300
    %320 = vmatprep.subr.bf16.mxu0 0
    %321 = vmatpush1.bf16.msra.mxu0 %v299
    %322 = vmatprep.subr.bf16.mxu0 0
    %323 = vmatpush1.bf16.msra.mxu0 %v298
    %324 = vmatprep.subr.bf16.mxu0 0
    %325 = vmatpush1.bf16.msra.mxu0 %v297
    %326 = vmatprep.subr.bf16.mxu0 0
    %327 = vmatpush1.bf16.msra.mxu0 %v296
    %328 = vmatprep.subr.bf16.mxu0 0
    %329 = vmatpush2.bf16.msra.mxu0 0
    %330 = vmatprep.subr.bf16.mxu0 0
    %331 = vmatpush2.bf16.msra.mxu0 0
    %332 = vmatprep.subr.bf16.mxu0 0
    %333 = vmatpush2.bf16.msra.mxu0 0
    %334 = vmatprep.subr.bf16.mxu0 0
    %335 = vmatpush2.bf16.msra.mxu0 0
    %336 = vmatprep.subr.bf16.mxu0 0
    %337 = vmatpush2.bf16.msra.mxu0 0
    %338 = vmatprep.subr.bf16.mxu0 0
    %339 = vmatpush2.bf16.msra.mxu0 0
    %340 = vmatprep.subr.bf16.mxu0 0
    %341 = vmatpush2.bf16.msra.mxu0 0
    %342 = vmatprep.subr.bf16.mxu0 0
    %343 = vmatpush2.bf16.msra.mxu0 0
    %344 = vmatprep.mubr.bf16.mxu0 0
    %345 = vmatmul.mubr.bf16.gmra.mxu0 %v242
    %v346 = vpop.f32.mrf.mxu0
    %v347 = vadd.f32 %v263, %v346
    %v348 = vpop.f32.mrf.mxu0
    %v349 = vpop.f32.mrf.mxu0
    %v350 = vpop.f32.mrf.mxu0
    %351 = vdwg.mxu0
    %vm352 = vcmp.ge.f32.partialorder %v347, 0.0
    %v353 = vmul.f32 %v347, 0.01
    %v354 = vsel %vm352, %v347, %v353
    %v355 = vpack.c.bf16 %v354, %v354
    %v356 = vld [vmem:[%s1 + $0xc0] sm:$0xf]
    %v357 = vld [vmem:[%s1 + $0xc4] sm:$0xf]
    %v358 = vld [vmem:[%s1 + $0xc8] sm:$0xf]
    %v359 = vld [vmem:[%s1 + $0xcc] sm:$0xf]
    %v360 = vld [vmem:[%s1 + $0xd0] sm:$0xf]
    %v361 = vld [vmem:[%s1 + $0xd4] sm:$0xf]
    %v362 = vld [vmem:[%s1 + $0xd8] sm:$0xf]
    %v363 = vld [vmem:[%s1 + $0xdc] sm:$0xf]
    %v364 = vld [vmem:[%s1 + $0xe0] sm:$0xf]
    %v365 = vld [vmem:[%s1 + $0xe4] sm:$0xf]
    %v366 = vld [vmem:[%s1 + $0xe8] sm:$0xf]
    %v367 = vld [vmem:[%s1 + $0xec] sm:$0xf]
    %v368 = vld [vmem:[%s1 + $0xf0] sm:$0xf]
    %v369 = vld [vmem:[%s1 + $0xf4] sm:$0xf]
    %v370 = vld [vmem:[%s1 + $0xf8] sm:$0xf]
    %v371 = vld [vmem:[%s1 + $0xfc] sm:$0xf]
    %v372 = vld [vmem:[%s2 + $0x3] sm:$0x1]
    %v373 = vlaneseq
    %v374 = vshrl.u32 %v373, 7
    %v375 = vsub.s32 0, %v374
    %v376 = vrot.slane %v372, %v375
    %v393 = vunpack.c.l.b16 %v356
    %v394 = vunpack.c.l.b16 %v357
    %v395 = vunpack.c.l.b16 %v358
    %v396 = vunpack.c.l.b16 %v359
    %v397 = vunpack.c.l.b16 %v360
    %v398 = vunpack.c.l.b16 %v361
    %v399 = vunpack.c.l.b16 %v362
    %v400 = vunpack.c.l.b16 %v363
    %v401 = vunpack.c.l.b16 %v364
    %v402 = vunpack.c.l.b16 %v365
    %v403 = vunpack.c.l.b16 %v366
    %v404 = vunpack.c.l.b16 %v367
    %v405 = vunpack.c.l.b16 %v368
    %v406 = vunpack.c.l.b16 %v369
    %v407 = vunpack.c.l.b16 %v370
    %v408 = vunpack.c.l.b16 %v371
    %v409 = vpack.c.b16 %v394, %v393
    %v410 = vpack.c.b16 %v396, %v395
    %v411 = vpack.c.b16 %v398, %v397
    %v412 = vpack.c.b16 %v400, %v399
    %v413 = vpack.c.b16 %v402, %v401
    %v414 = vpack.c.b16 %v404, %v403
    %v415 = vpack.c.b16 %v406, %v405
    %v416 = vpack.c.b16 %v408, %v407
    %425 = vmatprep.subr.bf16.mxu0 0
    %426 = vmatpush1.bf16.msra.mxu0 %v416
    %427 = vmatprep.subr.bf16.mxu0 0
    %428 = vmatpush1.bf16.msra.mxu0 %v415
    %429 = vmatprep.subr.bf16.mxu0 0
    %430 = vmatpush1.bf16.msra.mxu0 %v414
    %431 = vmatprep.subr.bf16.mxu0 0
    %432 = vmatpush1.bf16.msra.mxu0 %v413
    %433 = vmatprep.subr.bf16.mxu0 0
    %434 = vmatpush1.bf16.msra.mxu0 %v412
    %435 = vmatprep.subr.bf16.mxu0 0
    %436 = vmatpush1.bf16.msra.mxu0 %v411
    %437 = vmatprep.subr.bf16.mxu0 0
    %438 = vmatpush1.bf16.msra.mxu0 %v410
    %439 = vmatprep.subr.bf16.mxu0 0
    %440 = vmatpush1.bf16.msra.mxu0 %v409
    %441 = vmatprep.subr.bf16.mxu0 0
    %442 = vmatpush2.bf16.msra.mxu0 0
    %443 = vmatprep.subr.bf16.mxu0 0
    %444 = vmatpush2.bf16.msra.mxu0 0
    %445 = vmatprep.subr.bf16.mxu0 0
    %446 = vmatpush2.bf16.msra.mxu0 0
    %447 = vmatprep.subr.bf16.mxu0 0
    %448 = vmatpush2.bf16.msra.mxu0 0
    %449 = vmatprep.subr.bf16.mxu0 0
    %450 = vmatpush2.bf16.msra.mxu0 0
    %451 = vmatprep.subr.bf16.mxu0 0
    %452 = vmatpush2.bf16.msra.mxu0 0
    %453 = vmatprep.subr.bf16.mxu0 0
    %454 = vmatpush2.bf16.msra.mxu0 0
    %455 = vmatprep.subr.bf16.mxu0 0
    %456 = vmatpush2.bf16.msra.mxu0 0
    %457 = vmatprep.mubr.bf16.mxu0 0
    %458 = vmatmul.mubr.bf16.gmra.mxu0 %v355
    %v459 = vpop.f32.mrf.mxu0
    %v460 = vadd.f32 %v376, %v459
    %v461 = vpop.f32.mrf.mxu0
    %v462 = vpop.f32.mrf.mxu0
    %v463 = vpop.f32.mrf.mxu0
    %464 = vdwg.mxu0
    %465 = vst [vmem:[#allocation2] sm:$0xff] %v460
    // Predicated region
    $region14: #{prob_mlp_forward.1} parent=1 // pred_check
      _
    $region15: #{prob_mlp_forward.1} parent=1 // pred_check_branch
      %467 = sbr.rel (0) target = $region17
    $region16: #{prob_mlp_forward.1} parent=1 // pred_region
      %s469 = ssub.s32 128, 128
      %470 = vsyncadd [#allocation3], %s469
      %s472 = sshll.u32 [#allocation2], 4
      %s473 = int_to_ptr.vmem [resolvable:$true] %s472
      %475 = dma.vmem_to_hbm [thread:$0]  %s473, 128, %s3, [#allocation3]
    $region17: #{prob_mlp_forward.1} parent=1 // pred_fallthru
      _
    // Predicated region
    $region18: #{prob_mlp_forward.1} parent=1 // pred_check
      _
    $region19: #{prob_mlp_forward.1} parent=1 // pred_check_branch
      %477 = sbr.rel (0) target = $region21
    $region20: #{prob_mlp_forward.1} parent=1 // pred_region
      %478 = dma.done [#allocation3], 128
    $region21: #{prob_mlp_forward.1} parent=1 // pred_fallthru
      _
    %479 = vsyncpa [#allocation3], 1

</llo_original>
